<compile_context>
chip_gen: v6e
topology: v6e:2x2x1
jax: 0.10.0
libtpu: 0.0.40
codegen_flags: <defaults>
</compile_context>

<pallas_src>
import jax
import jax.numpy as jnp
from jax.experimental import pallas as pl
from jax.experimental.pallas import tpu as pltpu


def _round_up(n, m):
    return ((n + m - 1) // m) * m


def _dis_kernel(x_ref,
                w1_ref, b1_ref,
                w2_ref, b2_ref,
                w3_ref, b3_ref,
                w4_ref, b4_ref,
                o_ref):
    """Weights arrive pre-normalized in (out, in) layout, biases as (out, 1).

    Activations are carried feature-major (feat, tile_b) so the batch sits in the
    lane dimension: tanh/bias work on lane-dense vregs and the output row is a
    lane-dense (1, tile_b) store.
    """
    x = x_ref[...]                                                  # (tile_b, F)

    # Layer 1: contract feature dims of (60, F) and (tile_b, F) -> (60, tile_b).
    h = jax.lax.dot_general(w1_ref[...], x, (((1,), (1,)), ((), ())),
                            preferred_element_type=jnp.float32)
    h = jnp.tanh(h + b1_ref[...])

    # Layers 2-3: plain (out, in) @ (in, tile_b) matmuls.
    h = jnp.tanh(jnp.dot(w2_ref[...], h,
                         preferred_element_type=jnp.float32) + b2_ref[...])   # (30, tile_b)
    h = jnp.tanh(jnp.dot(w3_ref[...], h,
                         preferred_element_type=jnp.float32) + b3_ref[...])   # (10, tile_b)

    # Layer 4 (no tanh): (1, 10) @ (10, tile_b) -> lane-dense (1, tile_b).
    y = jnp.dot(w4_ref[...], h, preferred_element_type=jnp.float32) + b4_ref[...]
    o_ref[...] = y.astype(o_ref.dtype)


def dis_forward(x, params, *, max_tile_b=8192):
    """x: (B, data_size) float32.
    params: 4 tuples (w, scale, bias) in PyTorch layout: w (out, in), scale (out,), bias (out,)."""
    B, F = x.shape

    # ---- weight normalization hoisted into the wrapper (once, ~30 KB total) ---------
    nws, bs = [], []
    for (w, s, b) in params:
        inv = s[:, None] / jnp.sqrt(jnp.sum(w * w, axis=1, keepdims=True) + 1e-6)
        nws.append((w * inv).astype(jnp.float32))          # (out, in)
        bs.append(b.reshape(-1, 1).astype(jnp.float32))    # (out, 1) for feature-major adds

    # ---- batch tiling: size tiles from B so padding stays < 1 tile ------------------
    max_tile_b = max(128, _round_up(max_tile_b, 128))
    # >= cdiv(B, max_tile) tiles; for batches >= ~2k rows force >= 4 tiles so a v7x
    # 2-core "parallel" split still leaves >= 2 pipelined steps per core.
    n_tiles = max(1, pl.cdiv(B, max_tile_b), min(4, pl.cdiv(B, 512)))
    if n_tiles > 1:
        tile_b = _round_up(pl.cdiv(B, n_tiles), 128)   # output lane blocks stay 128-aligned
    else:
        tile_b = _round_up(B, 8)
    b_pad = tile_b * n_tiles

    if b_pad != B:
        x = jnp.pad(x, ((0, b_pad - B), (0, 0)))

    def resident(a):
        # Full-array block, constant index map -> stays VMEM-resident, DMA'd once.
        return pl.BlockSpec(a.shape, lambda i: (0, 0))

    flat = [x]
    in_specs = [pl.BlockSpec((tile_b, F), lambda i: (i, 0))]
    for nw, b in zip(nws, bs):
        flat += [nw, b]
        in_specs += [resident(nw), resident(b)]

    grid_spec = pltpu.PrefetchScalarGridSpec(
        num_scalar_prefetch=0,
        grid=(n_tiles,),
        in_specs=in_specs,
        out_specs=pl.BlockSpec((1, tile_b), lambda i: (0, i)),
    )

    out_row = pl.pallas_call(
        _dis_kernel,
        out_shape=jax.ShapeDtypeStruct((1, b_pad), jnp.float32),
        grid_spec=grid_spec,
        compiler_params=pltpu.CompilerParams(
            dimension_semantics=("parallel",)),
    )(*flat)

    return out_row[0, :B].reshape(B, 1)


def init_params(key, data_size=120):
    """Deterministic init matching WN_Linear._reset_parameters:
       weight ~ N(0, 0.05) in (out, in) layout, bias = 0, weight_scale = 1."""
    dims = [(data_size, 60), (60, 30), (30, 10), (10, 1)]
    params = []
    for (din, dout) in dims:
        key, sub = jax.random.split(key)
        w = 0.05 * jax.random.normal(sub, (dout, din), dtype=jnp.float32)
        params.append((w, jnp.ones((dout,), jnp.float32), jnp.zeros((dout,), jnp.float32)))
    return params


def dis_reference(x, params):
    """Plain-JAX reference (faithful to the PyTorch forward)."""
    h = x
    n = len(params)
    for i, (w, s, b) in enumerate(params):
        norm_w = w * (s[:, None] / jnp.sqrt(jnp.sum(w * w, axis=1, keepdims=True) + 1e-6))
        h = h @ norm_w.T + b[None, :]
        if i < n - 1:
            h = jnp.tanh(h)
    return h


if __name__ == "__main__":
    key = jax.random.PRNGKey(0)
    key, kx = jax.random.split(key)

    B, DATA_SIZE = 512, 120
    x = jax.random.normal(kx, (B, DATA_SIZE), dtype=jnp.float32)
    params = init_params(key, DATA_SIZE)

    # max_tile_b=128 -> 4 batch tiles: exercises streaming, resident weights,
    # feature-major activations and the lane-dense output path at this small batch.
    out = dis_forward(x, params, max_tile_b=128)
    out = jax.block_until_ready(out)
    ref = dis_reference(x, params)
    assert out.shape == (B, 1)
    assert jnp.allclose(out, ref, atol=1e-4, rtol=1e-4), float(jnp.max(jnp.abs(out - ref)))

    # Odd batch with default tiling: exercises the single-tile + zero-row-padding path.
    x2 = x[:300]
    out2 = jax.block_until_ready(dis_forward(x2, params))
    ref2 = dis_reference(x2, params)
    assert out2.shape == (300, 1)
    assert jnp.allclose(out2, ref2, atol=1e-4, rtol=1e-4), float(jnp.max(jnp.abs(out2 - ref2)))

    print("KERNEL_OK")
</pallas_src>

<mosaic_0001>
module attributes {stable_mosaic.version = 11 : i64} {
  func.func @_dis_kernel(%arg0: i32, %arg1: memref<128x120xf32, #tpu.memory_space<vmem>>, %arg2: memref<60x120xf32, #tpu.memory_space<vmem>>, %arg3: memref<60x1xf32, #tpu.memory_space<vmem>>, %arg4: memref<30x60xf32, #tpu.memory_space<vmem>>, %arg5: memref<30x1xf32, #tpu.memory_space<vmem>>, %arg6: memref<10x30xf32, #tpu.memory_space<vmem>>, %arg7: memref<10x1xf32, #tpu.memory_space<vmem>>, %arg8: memref<1x10xf32, #tpu.memory_space<vmem>>, %arg9: memref<1x1xf32, #tpu.memory_space<vmem>>, %arg10: memref<1x128xf32, #tpu.memory_space<vmem>>) attributes {dimension_semantics = [#tpu.dimension_semantics<parallel>], iteration_bounds = array<i64: 4>, scalar_prefetch = 0 : i64, scratch_operands = 0 : i64, tpu.core_type = #tpu.core_type<tc>, window_params = [{transform_indices = @transform_0, window_bounds = array<i64: 128, 120>}, {pipeline_mode = #tpu.pipeline_mode<synchronous>, transform_indices = @transform_1, window_bounds = array<i64: 60, 120>}, {pipeline_mode = #tpu.pipeline_mode<synchronous>, transform_indices = @transform_2, window_bounds = array<i64: 60, 1>}, {pipeline_mode = #tpu.pipeline_mode<synchronous>, transform_indices = @transform_3, window_bounds = array<i64: 30, 60>}, {pipeline_mode = #tpu.pipeline_mode<synchronous>, transform_indices = @transform_4, window_bounds = array<i64: 30, 1>}, {pipeline_mode = #tpu.pipeline_mode<synchronous>, transform_indices = @transform_5, window_bounds = array<i64: 10, 30>}, {pipeline_mode = #tpu.pipeline_mode<synchronous>, transform_indices = @transform_6, window_bounds = array<i64: 10, 1>}, {pipeline_mode = #tpu.pipeline_mode<synchronous>, transform_indices = @transform_7, window_bounds = array<i64: 1, 10>}, {pipeline_mode = #tpu.pipeline_mode<synchronous>, transform_indices = @transform_8, window_bounds = array<i64: 1, 1>}, {transform_indices = @transform_9, window_bounds = array<i64: 1, 128>}]} {
    %c0 = arith.constant 0 : index
    %c0_0 = arith.constant 0 : index
    %0 = vector.load %arg1[%c0, %c0_0] : memref<128x120xf32, #tpu.memory_space<vmem>>, vector<128x120xf32>
    %c0_1 = arith.constant 0 : index
    %c0_2 = arith.constant 0 : index
    %1 = vector.load %arg2[%c0_1, %c0_2] : memref<60x120xf32, #tpu.memory_space<vmem>>, vector<60x120xf32>
    %cst = arith.constant dense<0.000000e+00> : vector<60x128xf32>
    %2 = tpu.matmul %1, %0, %cst {dimension_numbers = #tpu.dot_dimension_numbers<[1], [1], [0], [0], [0, 0, 1, 0], [], []>} : vector<60x120xf32>, vector<128x120xf32>, vector<60x128xf32> -> vector<60x128xf32>
    %c0_3 = arith.constant 0 : index
    %c0_4 = arith.constant 0 : index
    %3 = vector.load %arg3[%c0_3, %c0_4] : memref<60x1xf32, #tpu.memory_space<vmem>>, vector<60x1xf32>
    %4 = vector.broadcast %3 : vector<60x1xf32> to vector<60x128xf32>
    %5 = arith.addf %2, %4 : vector<60x128xf32>
    %6 = math.tanh %5 : vector<60x128xf32>
    %c0_5 = arith.constant 0 : index
    %c0_6 = arith.constant 0 : index
    %7 = vector.load %arg4[%c0_5, %c0_6] : memref<30x60xf32, #tpu.memory_space<vmem>>, vector<30x60xf32>
    %cst_7 = arith.constant dense<0.000000e+00> : vector<30x128xf32>
    %8 = tpu.matmul %7, %6, %cst_7 {dimension_numbers = #tpu.dot_dimension_numbers<[1], [0], [0], [1], [0, 0, 1, 1], [], []>} : vector<30x60xf32>, vector<60x128xf32>, vector<30x128xf32> -> vector<30x128xf32>
    %c0_8 = arith.constant 0 : index
    %c0_9 = arith.constant 0 : index
    %9 = vector.load %arg5[%c0_8, %c0_9] : memref<30x1xf32, #tpu.memory_space<vmem>>, vector<30x1xf32>
    %10 = vector.broadcast %9 : vector<30x1xf32> to vector<30x128xf32>
    %11 = arith.addf %8, %10 : vector<30x128xf32>
    %12 = math.tanh %11 : vector<30x128xf32>
    %c0_10 = arith.constant 0 : index
    %c0_11 = arith.constant 0 : index
    %13 = vector.load %arg6[%c0_10, %c0_11] : memref<10x30xf32, #tpu.memory_space<vmem>>, vector<10x30xf32>
    %cst_12 = arith.constant dense<0.000000e+00> : vector<10x128xf32>
    %14 = tpu.matmul %13, %12, %cst_12 {dimension_numbers = #tpu.dot_dimension_numbers<[1], [0], [0], [1], [0, 0, 1, 1], [], []>} : vector<10x30xf32>, vector<30x128xf32>, vector<10x128xf32> -> vector<10x128xf32>
    %c0_13 = arith.constant 0 : index
    %c0_14 = arith.constant 0 : index
    %15 = vector.load %arg7[%c0_13, %c0_14] : memref<10x1xf32, #tpu.memory_space<vmem>>, vector<10x1xf32>
    %16 = vector.broadcast %15 : vector<10x1xf32> to vector<10x128xf32>
    %17 = arith.addf %14, %16 : vector<10x128xf32>
    %18 = math.tanh %17 : vector<10x128xf32>
    %c0_15 = arith.constant 0 : index
    %c0_16 = arith.constant 0 : index
    %19 = vector.load %arg8[%c0_15, %c0_16] : memref<1x10xf32, #tpu.memory_space<vmem>>, vector<1x10xf32>
    %cst_17 = arith.constant dense<0.000000e+00> : vector<1x128xf32>
    %20 = tpu.matmul %19, %18, %cst_17 {dimension_numbers = #tpu.dot_dimension_numbers<[1], [0], [0], [1], [0, 0, 1, 1], [], []>} : vector<1x10xf32>, vector<10x128xf32>, vector<1x128xf32> -> vector<1x128xf32>
    %c0_18 = arith.constant 0 : index
    %c0_19 = arith.constant 0 : index
    %21 = vector.load %arg9[%c0_18, %c0_19] : memref<1x1xf32, #tpu.memory_space<vmem>>, vector<1x1xf32>
    %22 = vector.broadcast %21 : vector<1x1xf32> to vector<1x128xf32>
    %23 = arith.addf %20, %22 : vector<1x128xf32>
    %c0_20 = arith.constant 0 : index
    %c0_21 = arith.constant 0 : index
    %24 = vector.load %arg10[%c0_20, %c0_21] : memref<1x128xf32, #tpu.memory_space<vmem>>, vector<1x128xf32>
    tpu.vector_store %arg10[%c0_20, %c0_21], %23 {strides = array<i32>} : memref<1x128xf32, #tpu.memory_space<vmem>>, vector<1x128xf32>,
    return
  }
  func.func @transform_0(%arg0: i32) -> (i32, i32) {
    %c0_i32 = arith.constant 0 : i32
    %c0_i32_0 = arith.constant 0 : i32
    return %arg0, %c0_i32 : i32, i32
  }
  func.func @transform_1(%arg0: i32) -> (i32, i32) {
    %c0_i32 = arith.constant 0 : i32
    %c0_i32_0 = arith.constant 0 : i32
    %c0_i32_1 = arith.constant 0 : i32
    return %c0_i32, %c0_i32_0 : i32, i32
  }
  func.func @transform_2(%arg0: i32) -> (i32, i32) {
    %c0_i32 = arith.constant 0 : i32
    %c0_i32_0 = arith.constant 0 : i32
    %c0_i32_1 = arith.constant 0 : i32
    return %c0_i32, %c0_i32_0 : i32, i32
  }
  func.func @transform_3(%arg0: i32) -> (i32, i32) {
    %c0_i32 = arith.constant 0 : i32
    %c0_i32_0 = arith.constant 0 : i32
    %c0_i32_1 = arith.constant 0 : i32
    return %c0_i32, %c0_i32_0 : i32, i32
  }
  func.func @transform_4(%arg0: i32) -> (i32, i32) {
    %c0_i32 = arith.constant 0 : i32
    %c0_i32_0 = arith.constant 0 : i32
    %c0_i32_1 = arith.constant 0 : i32
    return %c0_i32, %c0_i32_0 : i32, i32
  }
  func.func @transform_5(%arg0: i32) -> (i32, i32) {
    %c0_i32 = arith.constant 0 : i32
    %c0_i32_0 = arith.constant 0 : i32
    %c0_i32_1 = arith.constant 0 : i32
    return %c0_i32, %c0_i32_0 : i32, i32
  }
  func.func @transform_6(%arg0: i32) -> (i32, i32) {
    %c0_i32 = arith.constant 0 : i32
    %c0_i32_0 = arith.constant 0 : i32
    %c0_i32_1 = arith.constant 0 : i32
    return %c0_i32, %c0_i32_0 : i32, i32
  }
  func.func @transform_7(%arg0: i32) -> (i32, i32) {
    %c0_i32 = arith.constant 0 : i32
    %c0_i32_0 = arith.constant 0 : i32
    %c0_i32_1 = arith.constant 0 : i32
    return %c0_i32, %c0_i32_0 : i32, i32
  }
  func.func @transform_8(%arg0: i32) -> (i32, i32) {
    %c0_i32 = arith.constant 0 : i32
    %c0_i32_0 = arith.constant 0 : i32
    %c0_i32_1 = arith.constant 0 : i32
    return %c0_i32, %c0_i32_0 : i32, i32
  }
  func.func @transform_9(%arg0: i32) -> (i32, i32) {
    %c0_i32 = arith.constant 0 : i32
    %c0_i32_0 = arith.constant 0 : i32
    return %c0_i32, %arg0 : i32, i32
  }
}

</mosaic_0001>

<llo_original>
// kernel: tpu_custom_call.1
$region0: #{tpu_custom_call.1}
  #allocation0 [shape = 'u32[]', space=smem, size = 0x4, offset = 0x4, fixed_abs, tag = 'smem constant byte address 0x4 - core index']
  #allocation1 [shape = 'u32[144,128]{1,0:T(1,128)}', space=vmem, size = 0x12000, scoped, tag = 'internal scratch']
  #allocation2 [shape = 'f32[1,1]{1,0:T(1,128)S(1)}', space=vmem, size = 0x200, scoped, tag = 'scoped memory for tpu_custom_call.1']
  %s0 = inlined_call_operand.vmem [shape: f32[512,120], index: 0, kind: input, shape index: {}]
  %s1 = inlined_call_operand.vmem [shape: f32[60,120], index: 1, kind: input, shape index: {}]
  %s2 = inlined_call_operand.vmem [shape: f32[60,1], index: 2, kind: input, shape index: {}]
  %s3 = inlined_call_operand.vmem [shape: f32[30,60], index: 3, kind: input, shape index: {}]
  %s4 = inlined_call_operand.vmem [shape: f32[30,1], index: 4, kind: input, shape index: {}]
  %s5 = inlined_call_operand.vmem [shape: f32[10,30], index: 5, kind: input, shape index: {}]
  %s6 = inlined_call_operand.vmem [shape: f32[10,1], index: 6, kind: input, shape index: {}]
  %s7 = inlined_call_operand.vmem [shape: f32[1,10], index: 7, kind: input, shape index: {}]
  %s8 = inlined_call_operand.<no memory space> [shape: f32[1,1], index: 8, kind: input, shape index: {}]
  %s9 = inlined_call_operand.hbm [shape: f32[1,512], index: 9, kind: output, shape index: {}]
  %s10 = sld [smem:[#allocation0]]
  $region69: #{tpu_custom_call.1} parent=0
    _
  %s12 = ssub.s32 1, %s10
  %s13 = scalar_select 0, %s12, %s10
  %v14 = vstv %s8
  %15 = vst [vmem:[#allocation2] sm:$0x1] %v14
  $region1: #{tpu_custom_call.1} parent=0
    #allocation3 [shape = 'u8[1024]{0}', space=vmem, size = 0x400, scoped, tag = 'output window, operand 0']
    #allocation4 [shape = 's32[2]{0}', space=sflag, size = 0x8, scoped, tag = 'scoped memory for tpu_custom_call.1']
    %16 = vsyncpa [#allocation4], 0
    %s17 = scalar_lea.sflag [#allocation4], 1
    %18 = vsyncpa %s17, 0
    loop: start=0, step=1, limit=6
    $region2: #{tpu_custom_call.1} parent=1 // loop_pre_header
      _
    $region3: #{tpu_custom_call.1} parent=1 // loop_header
      %s20 = sphi 0, %s24
      %p21 = scmp.ge.s32.totalorder %s20, 6
      %s30 = sphi 0, %s32
      %s33 = sphi 0, %s30
      %s34 = sphi 0, %s33
      %s50 = sphi 0, %s34
      %s54 = sphi 0, %s54
      %s56 = sphi 0, %s54
      %s57 = sphi 0, %s56
      %s71 = sphi 0, %s57
      %s75 = sphi 0, %s75
      %s77 = sphi 0, %s75
      %s78 = sphi 0, %s77
      %s92 = sphi 0, %s78
      %s96 = sphi 0, %s96
      %s98 = sphi 0, %s96
      %s99 = sphi 0, %s98
      %s113 = sphi 0, %s99
      %s117 = sphi 0, %s117
      %s119 = sphi 0, %s117
      %s120 = sphi 0, %s119
      %s134 = sphi 0, %s120
      %s138 = sphi 0, %s138
      %s140 = sphi 0, %s138
      %s141 = sphi 0, %s140
      %s155 = sphi 0, %s141
      %s159 = sphi 0, %s159
      %s161 = sphi 0, %s159
      %s162 = sphi 0, %s161
      %s176 = sphi 0, %s162
      %s180 = sphi 0, %s180
      %s182 = sphi 0, %s180
      %s183 = sphi 0, %s182
      %s197 = sphi 0, %s183
      %s201 = sphi 0, %s201
      %s203 = sphi 0, %s201
      %s204 = sphi 0, %s203
      %s218 = sphi 0, %s204
      %s224 = sphi 0, %s226
      %s227 = sphi 0, %s224
      %s228 = sphi 0, %s227
      %s244 = sphi 0, %s228
    $region4: #{tpu_custom_call.1} parent=1 // loop_header_branch
      %23 = sbr.rel (%p21) target = $region8
    $region5: #{tpu_custom_call.1} parent=1 // loop_body
      %s25 = ssub.s32 %s20, 1
      %s26 = ssub.s32 %s20, 2
      %s27 = sadd.s32 %s20, 1
      %s28 = ssub.s32 %s20, %s27
      %p29 = scmp.eq.s32.totalorder %s28, 0
      %s31 = sadd.s32 %s30, 1
      %s32 = scalar_select %p29, %s30, %s31
      %p35 = pneg %p29
      %p36 = scmp.eq.s32.totalorder %s20, 3
      %p37 = por %p35, %p36
      %p38 = scmp.ne.s32.totalorder %s30, %s33
      %p39 = scmp.eq.s32.totalorder %s20, 0
      %p40 = por %p38, %p39
      %p41 = scmp.ne.s32.totalorder %s30, %s33
      %p42 = scmp.eq.s32.totalorder %s25, 3
      %p43 = por %p41, %p42
      %p44 = scmp.ne.s32.totalorder %s33, %s34
      %p45 = scmp.eq.s32.totalorder %s25, 0
      %p46 = por %p44, %p45
      %p47 = scmp.ne.s32.totalorder %s33, %s34
      %p48 = scmp.eq.s32.totalorder %s26, 3
      %p49 = por %p47, %p48
      %p51 = scmp.ne.s32.totalorder %s34, %s50
      %p52 = scmp.eq.s32.totalorder %s26, 0
      %p53 = por %p51, %p52
      %s55 = sadd.s32 %s54, 1
      %p58 = scmp.eq.s32.totalorder %s20, 3
      %p59 = scmp.ne.s32.totalorder %s54, %s56
      %p60 = scmp.eq.s32.totalorder %s20, 0
      %p61 = por %p59, %p60
      %p62 = scmp.ne.s32.totalorder %s54, %s56
      %p63 = scmp.eq.s32.totalorder %s25, 3
      %p64 = por %p62, %p63
      %p65 = scmp.ne.s32.totalorder %s56, %s57
      %p66 = scmp.eq.s32.totalorder %s25, 0
      %p67 = por %p65, %p66
      %p68 = scmp.ne.s32.totalorder %s56, %s57
      %p69 = scmp.eq.s32.totalorder %s26, 3
      %p70 = por %p68, %p69
      %p72 = scmp.ne.s32.totalorder %s57, %s71
      %p73 = scmp.eq.s32.totalorder %s26, 0
      %p74 = por %p72, %p73
      %s76 = sadd.s32 %s75, 1
      %p79 = scmp.eq.s32.totalorder %s20, 3
      %p80 = scmp.ne.s32.totalorder %s75, %s77
      %p81 = scmp.eq.s32.totalorder %s20, 0
      %p82 = por %p80, %p81
      %p83 = scmp.ne.s32.totalorder %s75, %s77
      %p84 = scmp.eq.s32.totalorder %s25, 3
      %p85 = por %p83, %p84
      %p86 = scmp.ne.s32.totalorder %s77, %s78
      %p87 = scmp.eq.s32.totalorder %s25, 0
      %p88 = por %p86, %p87
      %p89 = scmp.ne.s32.totalorder %s77, %s78
      %p90 = scmp.eq.s32.totalorder %s26, 3
      %p91 = por %p89, %p90
      %p93 = scmp.ne.s32.totalorder %s78, %s92
      %p94 = scmp.eq.s32.totalorder %s26, 0
      %p95 = por %p93, %p94
      %s97 = sadd.s32 %s96, 1
      %p100 = scmp.eq.s32.totalorder %s20, 3
      %p101 = scmp.ne.s32.totalorder %s96, %s98
      %p102 = scmp.eq.s32.totalorder %s20, 0
      %p103 = por %p101, %p102
      %p104 = scmp.ne.s32.totalorder %s96, %s98
      %p105 = scmp.eq.s32.totalorder %s25, 3
      %p106 = por %p104, %p105
      %p107 = scmp.ne.s32.totalorder %s98, %s99
      %p108 = scmp.eq.s32.totalorder %s25, 0
      %p109 = por %p107, %p108
      %p110 = scmp.ne.s32.totalorder %s98, %s99
      %p111 = scmp.eq.s32.totalorder %s26, 3
      %p112 = por %p110, %p111
      %p114 = scmp.ne.s32.totalorder %s99, %s113
      %p115 = scmp.eq.s32.totalorder %s26, 0
      %p116 = por %p114, %p115
      %s118 = sadd.s32 %s117, 1
      %p121 = scmp.eq.s32.totalorder %s20, 3
      %p122 = scmp.ne.s32.totalorder %s117, %s119
      %p123 = scmp.eq.s32.totalorder %s20, 0
      %p124 = por %p122, %p123
      %p125 = scmp.ne.s32.totalorder %s117, %s119
      %p126 = scmp.eq.s32.totalorder %s25, 3
      %p127 = por %p125, %p126
      %p128 = scmp.ne.s32.totalorder %s119, %s120
      %p129 = scmp.eq.s32.totalorder %s25, 0
      %p130 = por %p128, %p129
      %p131 = scmp.ne.s32.totalorder %s119, %s120
      %p132 = scmp.eq.s32.totalorder %s26, 3
      %p133 = por %p131, %p132
      %p135 = scmp.ne.s32.totalorder %s120, %s134
      %p136 = scmp.eq.s32.totalorder %s26, 0
      %p137 = por %p135, %p136
      %s139 = sadd.s32 %s138, 1
      %p142 = scmp.eq.s32.totalorder %s20, 3
      %p143 = scmp.ne.s32.totalorder %s138, %s140
      %p144 = scmp.eq.s32.totalorder %s20, 0
      %p145 = por %p143, %p144
      %p146 = scmp.ne.s32.totalorder %s138, %s140
      %p147 = scmp.eq.s32.totalorder %s25, 3
      %p148 = por %p146, %p147
      %p149 = scmp.ne.s32.totalorder %s140, %s141
      %p150 = scmp.eq.s32.totalorder %s25, 0
      %p151 = por %p149, %p150
      %p152 = scmp.ne.s32.totalorder %s140, %s141
      %p153 = scmp.eq.s32.totalorder %s26, 3
      %p154 = por %p152, %p153
      %p156 = scmp.ne.s32.totalorder %s141, %s155
      %p157 = scmp.eq.s32.totalorder %s26, 0
      %p158 = por %p156, %p157
      %s160 = sadd.s32 %s159, 1
      %p163 = scmp.eq.s32.totalorder %s20, 3
      %p164 = scmp.ne.s32.totalorder %s159, %s161
      %p165 = scmp.eq.s32.totalorder %s20, 0
      %p166 = por %p164, %p165
      %p167 = scmp.ne.s32.totalorder %s159, %s161
      %p168 = scmp.eq.s32.totalorder %s25, 3
      %p169 = por %p167, %p168
      %p170 = scmp.ne.s32.totalorder %s161, %s162
      %p171 = scmp.eq.s32.totalorder %s25, 0
      %p172 = por %p170, %p171
      %p173 = scmp.ne.s32.totalorder %s161, %s162
      %p174 = scmp.eq.s32.totalorder %s26, 3
      %p175 = por %p173, %p174
      %p177 = scmp.ne.s32.totalorder %s162, %s176
      %p178 = scmp.eq.s32.totalorder %s26, 0
      %p179 = por %p177, %p178
      %s181 = sadd.s32 %s180, 1
      %p184 = scmp.eq.s32.totalorder %s20, 3
      %p185 = scmp.ne.s32.totalorder %s180, %s182
      %p186 = scmp.eq.s32.totalorder %s20, 0
      %p187 = por %p185, %p186
      %p188 = scmp.ne.s32.totalorder %s180, %s182
      %p189 = scmp.eq.s32.totalorder %s25, 3
      %p190 = por %p188, %p189
      %p191 = scmp.ne.s32.totalorder %s182, %s183
      %p192 = scmp.eq.s32.totalorder %s25, 0
      %p193 = por %p191, %p192
      %p194 = scmp.ne.s32.totalorder %s182, %s183
      %p195 = scmp.eq.s32.totalorder %s26, 3
      %p196 = por %p194, %p195
      %p198 = scmp.ne.s32.totalorder %s183, %s197
      %p199 = scmp.eq.s32.totalorder %s26, 0
      %p200 = por %p198, %p199
      %s202 = sadd.s32 %s201, 1
      %p205 = scmp.eq.s32.totalorder %s20, 3
      %p206 = scmp.ne.s32.totalorder %s201, %s203
      %p207 = scmp.eq.s32.totalorder %s20, 0
      %p208 = por %p206, %p207
      %p209 = scmp.ne.s32.totalorder %s201, %s203
      %p210 = scmp.eq.s32.totalorder %s25, 3
      %p211 = por %p209, %p210
      %p212 = scmp.ne.s32.totalorder %s203, %s204
      %p213 = scmp.eq.s32.totalorder %s25, 0
      %p214 = por %p212, %p213
      %p215 = scmp.ne.s32.totalorder %s203, %s204
      %p216 = scmp.eq.s32.totalorder %s26, 3
      %p217 = por %p215, %p216
      %p219 = scmp.ne.s32.totalorder %s204, %s218
      %p220 = scmp.eq.s32.totalorder %s26, 0
      %p221 = por %p219, %p220
      %s222 = ssub.s32 %s20, %s27
      %p223 = scmp.eq.s32.totalorder %s222, 0
      %s225 = sadd.s32 %s224, 1
      %s226 = scalar_select %p223, %s224, %s225
      %p229 = pneg %p223
      %p230 = scmp.eq.s32.totalorder %s20, 3
      %p231 = por %p229, %p230
      %p232 = scmp.ne.s32.totalorder %s224, %s227
      %p233 = scmp.eq.s32.totalorder %s20, 0
      %p234 = por %p232, %p233
      %p235 = scmp.ne.s32.totalorder %s224, %s227
      %p236 = scmp.eq.s32.totalorder %s25, 3
      %p237 = por %p235, %p236
      %p238 = scmp.ne.s32.totalorder %s227, %s228
      %p239 = scmp.eq.s32.totalorder %s25, 0
      %p240 = por %p238, %p239
      %p241 = scmp.ne.s32.totalorder %s227, %s228
      %p242 = scmp.eq.s32.totalorder %s26, 3
      %p243 = por %p241, %p242
      %p245 = scmp.ne.s32.totalorder %s228, %s244
      %p246 = scmp.eq.s32.totalorder %s26, 0
      %p247 = por %p245, %p246
      %p248 = scmp.le.s32.totalorder 1, %s20
      %p249 = scmp.lt.s32.totalorder %s20, 5
      %p250 = pnand %p248, %p249
      %p251 = pneg %p250
      // Predicated region
      $region9: #{tpu_custom_call.1} parent=5 // pred_check
        _
      $region10: #{tpu_custom_call.1} parent=5 // pred_check_branch
        %253 = sbr.rel (%p250) target = $region12
      $region11: #{tpu_custom_call.1} parent=5 // pred_region
        %s254 = ssub.s32 %s20, 1
        // Predicated region
        $region13: #{tpu_custom_call.1} parent=11 // pred_check
          %p255 = pneg %p67
        $region14: #{tpu_custom_call.1} parent=11 // pred_check_branch
          %257 = sbr.rel (%p255) target = $region16
        $region15: #{tpu_custom_call.1} parent=11 // pred_region
          _
        $region16: #{tpu_custom_call.1} parent=11 // pred_fallthru
          _
        // Predicated region
        $region17: #{tpu_custom_call.1} parent=11 // pred_check
          %p258 = pneg %p88
        $region18: #{tpu_custom_call.1} parent=11 // pred_check_branch
          %260 = sbr.rel (%p258) target = $region20
        $region19: #{tpu_custom_call.1} parent=11 // pred_region
          _
        $region20: #{tpu_custom_call.1} parent=11 // pred_fallthru
          _
        // Predicated region
        $region21: #{tpu_custom_call.1} parent=11 // pred_check
          %p261 = pneg %p109
        $region22: #{tpu_custom_call.1} parent=11 // pred_check_branch
          %263 = sbr.rel (%p261) target = $region24
        $region23: #{tpu_custom_call.1} parent=11 // pred_region
          _
        $region24: #{tpu_custom_call.1} parent=11 // pred_fallthru
          _
        // Predicated region
        $region25: #{tpu_custom_call.1} parent=11 // pred_check
          %p264 = pneg %p130
        $region26: #{tpu_custom_call.1} parent=11 // pred_check_branch
          %266 = sbr.rel (%p264) target = $region28
        $region27: #{tpu_custom_call.1} parent=11 // pred_region
          _
        $region28: #{tpu_custom_call.1} parent=11 // pred_fallthru
          _
        // Predicated region
        $region29: #{tpu_custom_call.1} parent=11 // pred_check
          %p267 = pneg %p151
        $region30: #{tpu_custom_call.1} parent=11 // pred_check_branch
          %269 = sbr.rel (%p267) target = $region32
        $region31: #{tpu_custom_call.1} parent=11 // pred_region
          _
        $region32: #{tpu_custom_call.1} parent=11 // pred_fallthru
          _
        // Predicated region
        $region33: #{tpu_custom_call.1} parent=11 // pred_check
          %p270 = pneg %p172
        $region34: #{tpu_custom_call.1} parent=11 // pred_check_branch
          %272 = sbr.rel (%p270) target = $region36
        $region35: #{tpu_custom_call.1} parent=11 // pred_region
          _
        $region36: #{tpu_custom_call.1} parent=11 // pred_fallthru
          _
        // Predicated region
        $region37: #{tpu_custom_call.1} parent=11 // pred_check
          %p273 = pneg %p193
        $region38: #{tpu_custom_call.1} parent=11 // pred_check_branch
          %275 = sbr.rel (%p273) target = $region40
        $region39: #{tpu_custom_call.1} parent=11 // pred_region
          _
        $region40: #{tpu_custom_call.1} parent=11 // pred_fallthru
          _
        // Predicated region
        $region41: #{tpu_custom_call.1} parent=11 // pred_check
          %p276 = pneg %p214
        $region42: #{tpu_custom_call.1} parent=11 // pred_check_branch
          %278 = sbr.rel (%p276) target = $region44
        $region43: #{tpu_custom_call.1} parent=11 // pred_region
          _
        $region44: #{tpu_custom_call.1} parent=11 // pred_fallthru
          _
      $region12: #{tpu_custom_call.1} parent=5 // pred_fallthru
        _
      %p279 = scmp.lt.s32.totalorder %s20, 4
      // Predicated region
      $region45: #{tpu_custom_call.1} parent=5 // pred_check
        %p280 = pneg %p279
      $region46: #{tpu_custom_call.1} parent=5 // pred_check_branch
        %282 = sbr.rel (%p280) target = $region48
      $region47: #{tpu_custom_call.1} parent=5 // pred_region
        // Predicated region
        $region49: #{tpu_custom_call.1} parent=47 // pred_check
          %p283 = pneg %p40
        $region50: #{tpu_custom_call.1} parent=47 // pred_check_branch
          %285 = sbr.rel (%p283) target = $region52
        $region51: #{tpu_custom_call.1} parent=47 // pred_region
          %s286 = smul.u32 16, %s20
          %p287 = scmp.lt.s32.totalorder %s286, 63
          %s288 = scalar_select %p287, %s286, 63
          %s289 = smul.addr %s288, 8
          %s290 = scalar_lea.vmem %s0, %s289
          %s291 = smul.u32 16, %s20
        $region52: #{tpu_custom_call.1} parent=47 // pred_fallthru
          _
      $region48: #{tpu_custom_call.1} parent=5 // pred_fallthru
        _
      %p292 = scmp.le.s32.totalorder 1, %s20
      %p293 = scmp.lt.s32.totalorder %s20, 5
      %p294 = pnand %p292, %p293
      %p295 = pneg %p294
      // Predicated region
      $region53: #{tpu_custom_call.1} parent=5 // pred_check
        _
      $region54: #{tpu_custom_call.1} parent=5 // pred_check_branch
        %297 = sbr.rel (%p294) target = $region56
      $region55: #{tpu_custom_call.1} parent=5 // pred_region
        %s298 = ssub.s32 %s20, 1
        %s299 = smul.u32 16, %s25
        %p300 = scmp.lt.s32.totalorder %s299, 63
        %s301 = scalar_select %p300, %s299, 63
        %s302 = smul.addr %s301, 8
        %s303 = scalar_lea.vmem %s0, %s302
        %p304 = pneg %p46
        %p305 = pneg %p43
        %p306 = pneg %p67
        %p307 = pneg %p64
        %p308 = pneg %p88
        %p309 = pneg %p85
        %p310 = pneg %p109
        %p311 = pneg %p106
        %p312 = pneg %p130
        %p313 = pneg %p127
        %p314 = pneg %p151
        %p315 = pneg %p148
        %p316 = pneg %p172
        %p317 = pneg %p169
        %p318 = pneg %p193
        %p319 = pneg %p190
        %p320 = pneg %p214
        %p321 = pneg %p211
        %p322 = pneg %p240
        %p323 = pneg %p237
        %s324 = sand.u32 %s227, 1
        %s325 = scalar_lea.sflag [#allocation4], %s324
        %s326 = sand.u32 %s227, 1
        %s327 = scalar_lea.vmem [#allocation3], %s326
        %s328 = smul.u32 16, %s25
        %p329 = scmp.lt.s32.totalorder %s328, 63
        %s330 = scalar_select %p329, %s328, 63
        %s331 = smul.addr %s330, 8
        %s332 = scalar_lea.vmem %s0, %s331
        %s333 = smul.u32 16, %s25
        %v334 = vld [vmem:[%s332] sm:$0xff]
        %v335 = vld [vmem:[%s332 + $0x8] sm:$0xff]
        %v336 = vld [vmem:[%s332 + $0x10] sm:$0xff]
        %v337 = vld [vmem:[%s332 + $0x18] sm:$0xff]
        %v338 = vld [vmem:[%s332 + $0x20] sm:$0xff]
        %v339 = vld [vmem:[%s332 + $0x28] sm:$0xff]
        %v340 = vld [vmem:[%s332 + $0x30] sm:$0xff]
        %v341 = vld [vmem:[%s332 + $0x38] sm:$0xff]
        %v342 = vld [vmem:[%s332 + $0x40] sm:$0xff]
        %v343 = vld [vmem:[%s332 + $0x48] sm:$0xff]
        %v344 = vld [vmem:[%s332 + $0x50] sm:$0xff]
        %v345 = vld [vmem:[%s332 + $0x58] sm:$0xff]
        %v346 = vld [vmem:[%s332 + $0x60] sm:$0xff]
        %v347 = vld [vmem:[%s332 + $0x68] sm:$0xff]
        %v348 = vld [vmem:[%s332 + $0x70] sm:$0xff]
        %v349 = vld [vmem:[%s332 + $0x78] sm:$0xff]
        %v350 = vld [vmem:[%s1] sm:$0xff]
        %v351 = vld [vmem:[%s1 + $0x8] sm:$0xff]
        %v352 = vld [vmem:[%s1 + $0x10] sm:$0xff]
        %v353 = vld [vmem:[%s1 + $0x18] sm:$0xff]
        %v354 = vld [vmem:[%s1 + $0x20] sm:$0xff]
        %v355 = vld [vmem:[%s1 + $0x28] sm:$0xff]
        %v356 = vld [vmem:[%s1 + $0x30] sm:$0xff]
        %v357 = vld [vmem:[%s1 + $0x38] sm:$0xf]
        %v358 = vld [vmem:[%s2] sm:$0xff]
        %v359 = vld [vmem:[%s2 + $0x8] sm:$0xff]
        %v360 = vld [vmem:[%s2 + $0x10] sm:$0xff]
        %v361 = vld [vmem:[%s2 + $0x18] sm:$0xff]
        %v362 = vld [vmem:[%s2 + $0x20] sm:$0xff]
        %v363 = vld [vmem:[%s2 + $0x28] sm:$0xff]
        %v364 = vld [vmem:[%s2 + $0x30] sm:$0xff]
        %v365 = vld [vmem:[%s2 + $0x38] sm:$0xf]
        %367 = vset.pattern.permute.xlu0 0
        %368 = vperm.xlu0 %367, %v358
        %v369 = vpop.permute.xlu0 %368
        %372 = vset.pattern.permute.xlu0 0
        %373 = vperm.xlu0 %372, %v359
        %v374 = vpop.permute.xlu0 %373
        %377 = vset.pattern.permute.xlu0 0
        %378 = vperm.xlu0 %377, %v360
        %v379 = vpop.permute.xlu0 %378
        %382 = vset.pattern.permute.xlu0 0
        %383 = vperm.xlu0 %382, %v361
        %v384 = vpop.permute.xlu0 %383
        %387 = vset.pattern.permute.xlu0 0
        %388 = vperm.xlu0 %387, %v362
        %v389 = vpop.permute.xlu0 %388
        %392 = vset.pattern.permute.xlu0 0
        %393 = vperm.xlu0 %392, %v363
        %v394 = vpop.permute.xlu0 %393
        %397 = vset.pattern.permute.xlu0 0
        %398 = vperm.xlu0 %397, %v364
        %v399 = vpop.permute.xlu0 %398
        %402 = vset.pattern.permute.xlu0 0
        %403 = vperm.xlu0 %402, %v365
        %v404 = vpop.permute.xlu0 %403
        %vm406 = vcmask 982016
        %v408 = vsel %vm406, %v350, 0
        %v411 = vsel %vm406, %v351, 0
        %v414 = vsel %vm406, %v352, 0
        %v417 = vsel %vm406, %v353, 0
        %v420 = vsel %vm406, %v354, 0
        %v423 = vsel %vm406, %v355, 0
        %v426 = vsel %vm406, %v356, 0
        %v429 = vsel %vm406, %v357, 0
        %v432 = vsel %vm406, %v334, 0
        %v435 = vsel %vm406, %v335, 0
        %v438 = vsel %vm406, %v336, 0
        %v441 = vsel %vm406, %v337, 0
        %v444 = vsel %vm406, %v338, 0
        %v447 = vsel %vm406, %v339, 0
        %v450 = vsel %vm406, %v340, 0
        %v453 = vsel %vm406, %v341, 0
        %v456 = vsel %vm406, %v342, 0
        %v459 = vsel %vm406, %v343, 0
        %v462 = vsel %vm406, %v344, 0
        %v465 = vsel %vm406, %v345, 0
        %v468 = vsel %vm406, %v346, 0
        %v471 = vsel %vm406, %v347, 0
        %v474 = vsel %vm406, %v348, 0
        %v477 = vsel %vm406, %v349, 0
        %479 = vmatprep.subr.mxu0 0.0
        %480 = vmatpush1.xpose.msra.mxu0 %v477
        %481 = vmatprep.subr.mxu0 0.0
        %482 = vmatpush1.xpose.msra.mxu0 %v474
        %483 = vmatprep.subr.mxu0 0.0
        %484 = vmatpush1.xpose.msra.mxu0 %v471
        %485 = vmatprep.subr.mxu0 0.0
        %486 = vmatpush1.xpose.msra.mxu0 %v468
        %487 = vmatprep.subr.mxu0 0.0
        %488 = vmatpush1.xpose.msra.mxu0 %v465
        %489 = vmatprep.subr.mxu0 0.0
        %490 = vmatpush1.xpose.msra.mxu0 %v462
        %491 = vmatprep.subr.mxu0 0.0
        %492 = vmatpush1.xpose.msra.mxu0 %v459
        %493 = vmatprep.subr.mxu0 0.0
        %494 = vmatpush1.xpose.msra.mxu0 %v456
        %495 = vmatprep.subr.mxu0 0.0
        %496 = vmatpush1.xpose.msra.mxu0 %v453
        %497 = vmatprep.subr.mxu0 0.0
        %498 = vmatpush1.xpose.msra.mxu0 %v450
        %499 = vmatprep.subr.mxu0 0.0
        %500 = vmatpush1.xpose.msra.mxu0 %v447
        %501 = vmatprep.subr.mxu0 0.0
        %502 = vmatpush1.xpose.msra.mxu0 %v444
        %503 = vmatprep.subr.mxu0 0.0
        %504 = vmatpush1.xpose.msra.mxu0 %v441
        %505 = vmatprep.subr.mxu0 0.0
        %506 = vmatpush1.xpose.msra.mxu0 %v438
        %507 = vmatprep.subr.mxu0 0.0
        %508 = vmatpush1.xpose.msra.mxu0 %v435
        %509 = vmatprep.subr.mxu0 0.0
        %510 = vmatpush1.xpose.msra.mxu0 %v432
        %511 = vmatprep.subr.mxu0 0.0
        %512 = vmatpush2.xpose.msra.mxu0 0.0
        %513 = vmatprep.subr.mxu0 0.0
        %514 = vmatpush2.xpose.msra.mxu0 0.0
        %515 = vmatprep.subr.mxu0 0.0
        %516 = vmatpush2.xpose.msra.mxu0 0.0
        %517 = vmatprep.subr.mxu0 0.0
        %518 = vmatpush2.xpose.msra.mxu0 0.0
        %519 = vmatprep.subr.mxu0 0.0
        %520 = vmatpush2.xpose.msra.mxu0 0.0
        %521 = vmatprep.subr.mxu0 0.0
        %522 = vmatpush2.xpose.msra.mxu0 0.0
        %523 = vmatprep.subr.mxu0 0.0
        %524 = vmatpush2.xpose.msra.mxu0 0.0
        %525 = vmatprep.subr.mxu0 0.0
        %526 = vmatpush2.xpose.msra.mxu0 0.0
        %527 = vmatprep.subr.mxu0 0.0
        %528 = vmatpush2.xpose.msra.mxu0 0.0
        %529 = vmatprep.subr.mxu0 0.0
        %530 = vmatpush2.xpose.msra.mxu0 0.0
        %531 = vmatprep.subr.mxu0 0.0
        %532 = vmatpush2.xpose.msra.mxu0 0.0
        %533 = vmatprep.subr.mxu0 0.0
        %534 = vmatpush2.xpose.msra.mxu0 0.0
        %535 = vmatprep.subr.mxu0 0.0
        %536 = vmatpush2.xpose.msra.mxu0 0.0
        %537 = vmatprep.subr.mxu0 0.0
        %538 = vmatpush2.xpose.msra.mxu0 0.0
        %539 = vmatprep.subr.mxu0 0.0
        %540 = vmatpush2.xpose.msra.mxu0 0.0
        %541 = vmatprep.subr.mxu0 0.0
        %542 = vmatpush2.xpose.msra.mxu0 0.0
        %543 = vmatprep.mubr.f32.mxu0 0.0
        %544 = vmatmul.mubr.f32.gmra.mxu0 %v408
        %v545 = vpop.f32.mrf.mxu0
        %v546 = vadd.f32 %v369, %v545
        %v547 = vpop.f32.mrf.mxu0
        %548 = vmatprep.mubr.f32.mxu0 0.0
        %549 = vmatmul.mubr.f32.gmra.mxu0 %v411
        %v550 = vpop.f32.mrf.mxu0
        %v551 = vadd.f32 %v374, %v550
        %v552 = vpop.f32.mrf.mxu0
        %553 = vmatprep.mubr.f32.mxu0 0.0
        %554 = vmatmul.mubr.f32.gmra.mxu0 %v414
        %v555 = vpop.f32.mrf.mxu0
        %v556 = vadd.f32 %v379, %v555
        %v557 = vpop.f32.mrf.mxu0
        %558 = vmatprep.mubr.f32.mxu0 0.0
        %559 = vmatmul.mubr.f32.gmra.mxu0 %v417
        %v560 = vpop.f32.mrf.mxu0
        %v561 = vadd.f32 %v384, %v560
        %v562 = vpop.f32.mrf.mxu0
        %563 = vmatprep.mubr.f32.mxu0 0.0
        %564 = vmatmul.mubr.f32.gmra.mxu0 %v420
        %v565 = vpop.f32.mrf.mxu0
        %v566 = vadd.f32 %v389, %v565
        %v567 = vpop.f32.mrf.mxu0
        %568 = vmatprep.mubr.f32.mxu0 0.0
        %569 = vmatmul.mubr.f32.gmra.mxu0 %v423
        %v570 = vpop.f32.mrf.mxu0
        %v571 = vadd.f32 %v394, %v570
        %v572 = vpop.f32.mrf.mxu0
        %573 = vmatprep.mubr.f32.mxu0 0.0
        %574 = vmatmul.mubr.f32.gmra.mxu0 %v426
        %v575 = vpop.f32.mrf.mxu0
        %v576 = vadd.f32 %v399, %v575
        %v577 = vpop.f32.mrf.mxu0
        %578 = vmatprep.mubr.f32.mxu0 0.0
        %579 = vmatmul.mubr.f32.gmra.mxu0 %v429
        %v580 = vpop.f32.mrf.mxu0
        %v581 = vadd.f32 %v404, %v580
        %v582 = vpop.f32.mrf.mxu0
        %583 = vdwg.mxu0
        %v584 = vtanh.pop %v546
        %v585 = vtanh.pop %v551
        %v586 = vtanh.pop %v556
        %v587 = vtanh.pop %v561
        %v588 = vtanh.pop %v566
        %v589 = vtanh.pop %v571
        %v590 = vtanh.pop %v576
        %v591 = vtanh.pop %v581
        %v592 = vld [vmem:[%s3] sm:$0xff]
        %v593 = vld [vmem:[%s3 + $0x8] sm:$0xff]
        %v594 = vld [vmem:[%s3 + $0x10] sm:$0xff]
        %v595 = vld [vmem:[%s3 + $0x18] sm:$0x3f]
        %v596 = vld [vmem:[%s4] sm:$0xff]
        %v597 = vld [vmem:[%s4 + $0x8] sm:$0xff]
        %v598 = vld [vmem:[%s4 + $0x10] sm:$0xff]
        %v599 = vld [vmem:[%s4 + $0x18] sm:$0x3f]
        %601 = vset.pattern.permute.xlu0 0
        %602 = vperm.xlu0 %601, %v596
        %v603 = vpop.permute.xlu0 %602
        %606 = vset.pattern.permute.xlu0 0
        %607 = vperm.xlu0 %606, %v597
        %v608 = vpop.permute.xlu0 %607
        %611 = vset.pattern.permute.xlu0 0
        %612 = vperm.xlu0 %611, %v598
        %v613 = vpop.permute.xlu0 %612
        %616 = vset.pattern.permute.xlu0 0
        %617 = vperm.xlu0 %616, %v599
        %v618 = vpop.permute.xlu0 %617
        %vm620 = vcmask 490496
        %v622 = vsel %vm620, %v592, 0
        %v625 = vsel %vm620, %v593, 0
        %v628 = vsel %vm620, %v594, 0
        %v631 = vsel %vm620, %v595, 0
        %vm633 = vcmask 1043456
        %v635 = vsel %vm633, %v591, 0
        %637 = vmatprep.subr.mxu0 0.0
        %638 = vmatpush1.msra.mxu0 0.0
        %639 = vmatprep.subr.mxu0 0.0
        %640 = vmatpush1.msra.mxu0 0.0
        %641 = vmatprep.subr.mxu0 0.0
        %642 = vmatpush1.msra.mxu0 0.0
        %643 = vmatprep.subr.mxu0 0.0
        %644 = vmatpush1.msra.mxu0 0.0
        %645 = vmatprep.subr.mxu0 0.0
        %646 = vmatpush1.msra.mxu0 0.0
        %647 = vmatprep.subr.mxu0 0.0
        %648 = vmatpush1.msra.mxu0 0.0
        %649 = vmatprep.subr.mxu0 0.0
        %650 = vmatpush1.msra.mxu0 0.0
        %651 = vmatprep.subr.mxu0 0.0
        %652 = vmatpush1.msra.mxu0 0.0
        %653 = vmatprep.subr.mxu0 0.0
        %654 = vmatpush1.msra.mxu0 %v635
        %655 = vmatprep.subr.mxu0 0.0
        %656 = vmatpush1.msra.mxu0 %v590
        %657 = vmatprep.subr.mxu0 0.0
        %658 = vmatpush1.msra.mxu0 %v589
        %659 = vmatprep.subr.mxu0 0.0
        %660 = vmatpush1.msra.mxu0 %v588
        %661 = vmatprep.subr.mxu0 0.0
        %662 = vmatpush1.msra.mxu0 %v587
        %663 = vmatprep.subr.mxu0 0.0
        %664 = vmatpush1.msra.mxu0 %v586
        %665 = vmatprep.subr.mxu0 0.0
        %666 = vmatpush1.msra.mxu0 %v585
        %667 = vmatprep.subr.mxu0 0.0
        %668 = vmatpush1.msra.mxu0 %v584
        %669 = vmatprep.subr.mxu0 0.0
        %670 = vmatpush2.msra.mxu0 0.0
        %671 = vmatprep.subr.mxu0 0.0
        %672 = vmatpush2.msra.mxu0 0.0
        %673 = vmatprep.subr.mxu0 0.0
        %674 = vmatpush2.msra.mxu0 0.0
        %675 = vmatprep.subr.mxu0 0.0
        %676 = vmatpush2.msra.mxu0 0.0
        %677 = vmatprep.subr.mxu0 0.0
        %678 = vmatpush2.msra.mxu0 0.0
        %679 = vmatprep.subr.mxu0 0.0
        %680 = vmatpush2.msra.mxu0 0.0
        %681 = vmatprep.subr.mxu0 0.0
        %682 = vmatpush2.msra.mxu0 0.0
        %683 = vmatprep.subr.mxu0 0.0
        %684 = vmatpush2.msra.mxu0 0.0
        %685 = vmatprep.subr.mxu0 0.0
        %686 = vmatpush2.msra.mxu0 0.0
        %687 = vmatprep.subr.mxu0 0.0
        %688 = vmatpush2.msra.mxu0 0.0
        %689 = vmatprep.subr.mxu0 0.0
        %690 = vmatpush2.msra.mxu0 0.0
        %691 = vmatprep.subr.mxu0 0.0
        %692 = vmatpush2.msra.mxu0 0.0
        %693 = vmatprep.subr.mxu0 0.0
        %694 = vmatpush2.msra.mxu0 0.0
        %695 = vmatprep.subr.mxu0 0.0
        %696 = vmatpush2.msra.mxu0 0.0
        %697 = vmatprep.subr.mxu0 0.0
        %698 = vmatpush2.msra.mxu0 0.0
        %699 = vmatprep.subr.mxu0 0.0
        %700 = vmatpush2.msra.mxu0 0.0
        %701 = vmatprep.mubr.f32.mxu0 0.0
        %702 = vmatmul.mubr.f32.gmra.mxu0 %v622
        %v703 = vpop.f32.mrf.mxu0
        %v704 = vadd.f32 %v603, %v703
        %v705 = vpop.f32.mrf.mxu0
        %706 = vmatprep.mubr.f32.mxu0 0.0
        %707 = vmatmul.mubr.f32.gmra.mxu0 %v625
        %v708 = vpop.f32.mrf.mxu0
        %v709 = vadd.f32 %v608, %v708
        %v710 = vpop.f32.mrf.mxu0
        %711 = vmatprep.mubr.f32.mxu0 0.0
        %712 = vmatmul.mubr.f32.gmra.mxu0 %v628
        %v713 = vpop.f32.mrf.mxu0
        %v714 = vadd.f32 %v613, %v713
        %v715 = vpop.f32.mrf.mxu0
        %716 = vmatprep.mubr.f32.mxu0 0.0
        %717 = vmatmul.mubr.f32.gmra.mxu0 %v631
        %v718 = vpop.f32.mrf.mxu0
        %v719 = vadd.f32 %v618, %v718
        %v720 = vpop.f32.mrf.mxu0
        %721 = vdwg.mxu0
        %v722 = vtanh.pop %v704
        %v723 = vtanh.pop %v709
        %v724 = vtanh.pop %v714
        %v725 = vtanh.pop %v719
        %v726 = vld [vmem:[%s5] sm:$0xff]
        %v727 = vld [vmem:[%s5 + $0x8] sm:$0x3]
        %v728 = vld [vmem:[%s6] sm:$0xff]
        %v729 = vld [vmem:[%s6 + $0x8] sm:$0x3]
        %731 = vset.pattern.permute.xlu0 0
        %732 = vperm.xlu0 %731, %v728
        %v733 = vpop.permute.xlu0 %732
        %736 = vset.pattern.permute.xlu0 0
        %737 = vperm.xlu0 %736, %v729
        %v738 = vpop.permute.xlu0 %737
        %vm740 = vcmask 244736
        %v742 = vsel %vm740, %v726, 0
        %v745 = vsel %vm740, %v727, 0
        %vm747 = vcmask 1045504
        %v749 = vsel %vm747, %v725, 0
        %751 = vmatprep.subr.mxu0 0.0
        %752 = vmatpush1.msra.mxu0 0.0
        %753 = vmatprep.subr.mxu0 0.0
        %754 = vmatpush1.msra.mxu0 0.0
        %755 = vmatprep.subr.mxu0 0.0
        %756 = vmatpush1.msra.mxu0 0.0
        %757 = vmatprep.subr.mxu0 0.0
        %758 = vmatpush1.msra.mxu0 0.0
        %759 = vmatprep.subr.mxu0 0.0
        %760 = vmatpush1.msra.mxu0 0.0
        %761 = vmatprep.subr.mxu0 0.0
        %762 = vmatpush1.msra.mxu0 0.0
        %763 = vmatprep.subr.mxu0 0.0
        %764 = vmatpush1.msra.mxu0 0.0
        %765 = vmatprep.subr.mxu0 0.0
        %766 = vmatpush1.msra.mxu0 0.0
        %767 = vmatprep.subr.mxu0 0.0
        %768 = vmatpush1.msra.mxu0 0.0
        %769 = vmatprep.subr.mxu0 0.0
        %770 = vmatpush1.msra.mxu0 0.0
        %771 = vmatprep.subr.mxu0 0.0
        %772 = vmatpush1.msra.mxu0 0.0
        %773 = vmatprep.subr.mxu0 0.0
        %774 = vmatpush1.msra.mxu0 0.0
        %775 = vmatprep.subr.mxu0 0.0
        %776 = vmatpush1.msra.mxu0 %v749
        %777 = vmatprep.subr.mxu0 0.0
        %778 = vmatpush1.msra.mxu0 %v724
        %779 = vmatprep.subr.mxu0 0.0
        %780 = vmatpush1.msra.mxu0 %v723
        %781 = vmatprep.subr.mxu0 0.0
        %782 = vmatpush1.msra.mxu0 %v722
        %783 = vmatprep.subr.mxu0 0.0
        %784 = vmatpush2.msra.mxu0 0.0
        %785 = vmatprep.subr.mxu0 0.0
        %786 = vmatpush2.msra.mxu0 0.0
        %787 = vmatprep.subr.mxu0 0.0
        %788 = vmatpush2.msra.mxu0 0.0
        %789 = vmatprep.subr.mxu0 0.0
        %790 = vmatpush2.msra.mxu0 0.0
        %791 = vmatprep.subr.mxu0 0.0
        %792 = vmatpush2.msra.mxu0 0.0
        %793 = vmatprep.subr.mxu0 0.0
        %794 = vmatpush2.msra.mxu0 0.0
        %795 = vmatprep.subr.mxu0 0.0
        %796 = vmatpush2.msra.mxu0 0.0
        %797 = vmatprep.subr.mxu0 0.0
        %798 = vmatpush2.msra.mxu0 0.0
        %799 = vmatprep.subr.mxu0 0.0
        %800 = vmatpush2.msra.mxu0 0.0
        %801 = vmatprep.subr.mxu0 0.0
        %802 = vmatpush2.msra.mxu0 0.0
        %803 = vmatprep.subr.mxu0 0.0
        %804 = vmatpush2.msra.mxu0 0.0
        %805 = vmatprep.subr.mxu0 0.0
        %806 = vmatpush2.msra.mxu0 0.0
        %807 = vmatprep.subr.mxu0 0.0
        %808 = vmatpush2.msra.mxu0 0.0
        %809 = vmatprep.subr.mxu0 0.0
        %810 = vmatpush2.msra.mxu0 0.0
        %811 = vmatprep.subr.mxu0 0.0
        %812 = vmatpush2.msra.mxu0 0.0
        %813 = vmatprep.subr.mxu0 0.0
        %814 = vmatpush2.msra.mxu0 0.0
        %815 = vmatprep.mubr.f32.mxu0 0.0
        %816 = vmatmul.mubr.f32.gmra.mxu0 %v742
        %v817 = vpop.f32.mrf.mxu0
        %v818 = vadd.f32 %v733, %v817
        %v819 = vpop.f32.mrf.mxu0
        %820 = vmatprep.mubr.f32.mxu0 0.0
        %821 = vmatmul.mubr.f32.gmra.mxu0 %v745
        %v822 = vpop.f32.mrf.mxu0
        %v823 = vadd.f32 %v738, %v822
        %v824 = vpop.f32.mrf.mxu0
        %825 = vdwg.mxu0
        %v826 = vtanh.pop %v818
        %v827 = vtanh.pop %v823
        %v828 = vld [vmem:[%s7] sm:$0x1]
        %v829 = vld [vmem:[#allocation2] sm:$0x1]
        %831 = vset.pattern.permute.xlu0 0
        %832 = vperm.xlu0 %831, %v829
        %v833 = vpop.permute.xlu0 %832
        %v835 = vlaneseq
        %v836 = vshrl.u32 %v835, 7
        %v837 = vsub.s32 0, %v836
        %v838 = vrot.slane %v833, %v837
        %vm839 = vcmask 80896
        %v841 = vsel %vm839, %v828, 0
        %vm843 = vcmask 1041408
        %v845 = vsel %vm843, %v827, 0
        %847 = vmatprep.subr.mxu0 0.0
        %848 = vmatpush1.msra.mxu0 0.0
        %849 = vmatprep.subr.mxu0 0.0
        %850 = vmatpush1.msra.mxu0 0.0
        %851 = vmatprep.subr.mxu0 0.0
        %852 = vmatpush1.msra.mxu0 0.0
        %853 = vmatprep.subr.mxu0 0.0
        %854 = vmatpush1.msra.mxu0 0.0
        %855 = vmatprep.subr.mxu0 0.0
        %856 = vmatpush1.msra.mxu0 0.0
        %857 = vmatprep.subr.mxu0 0.0
        %858 = vmatpush1.msra.mxu0 0.0
        %859 = vmatprep.subr.mxu0 0.0
        %860 = vmatpush1.msra.mxu0 0.0
        %861 = vmatprep.subr.mxu0 0.0
        %862 = vmatpush1.msra.mxu0 0.0
        %863 = vmatprep.subr.mxu0 0.0
        %864 = vmatpush1.msra.mxu0 0.0
        %865 = vmatprep.subr.mxu0 0.0
        %866 = vmatpush1.msra.mxu0 0.0
        %867 = vmatprep.subr.mxu0 0.0
        %868 = vmatpush1.msra.mxu0 0.0
        %869 = vmatprep.subr.mxu0 0.0
        %870 = vmatpush1.msra.mxu0 0.0
        %871 = vmatprep.subr.mxu0 0.0
        %872 = vmatpush1.msra.mxu0 0.0
        %873 = vmatprep.subr.mxu0 0.0
        %874 = vmatpush1.msra.mxu0 0.0
        %875 = vmatprep.subr.mxu0 0.0
        %876 = vmatpush1.msra.mxu0 %v845
        %877 = vmatprep.subr.mxu0 0.0
        %878 = vmatpush1.msra.mxu0 %v826
        %879 = vmatprep.subr.mxu0 0.0
        %880 = vmatpush2.msra.mxu0 0.0
        %881 = vmatprep.subr.mxu0 0.0
        %882 = vmatpush2.msra.mxu0 0.0
        %883 = vmatprep.subr.mxu0 0.0
        %884 = vmatpush2.msra.mxu0 0.0
        %885 = vmatprep.subr.mxu0 0.0
        %886 = vmatpush2.msra.mxu0 0.0
        %887 = vmatprep.subr.mxu0 0.0
        %888 = vmatpush2.msra.mxu0 0.0
        %889 = vmatprep.subr.mxu0 0.0
        %890 = vmatpush2.msra.mxu0 0.0
        %891 = vmatprep.subr.mxu0 0.0
        %892 = vmatpush2.msra.mxu0 0.0
        %893 = vmatprep.subr.mxu0 0.0
        %894 = vmatpush2.msra.mxu0 0.0
        %895 = vmatprep.subr.mxu0 0.0
        %896 = vmatpush2.msra.mxu0 0.0
        %897 = vmatprep.subr.mxu0 0.0
        %898 = vmatpush2.msra.mxu0 0.0
        %899 = vmatprep.subr.mxu0 0.0
        %900 = vmatpush2.msra.mxu0 0.0
        %901 = vmatprep.subr.mxu0 0.0
        %902 = vmatpush2.msra.mxu0 0.0
        %903 = vmatprep.subr.mxu0 0.0
        %904 = vmatpush2.msra.mxu0 0.0
        %905 = vmatprep.subr.mxu0 0.0
        %906 = vmatpush2.msra.mxu0 0.0
        %907 = vmatprep.subr.mxu0 0.0
        %908 = vmatpush2.msra.mxu0 0.0
        %909 = vmatprep.subr.mxu0 0.0
        %910 = vmatpush2.msra.mxu0 0.0
        %911 = vmatprep.mubr.f32.mxu0 0.0
        %912 = vmatmul.mubr.f32.gmra.mxu0 %v841
        %v913 = vpop.f32.mrf.mxu0
        %v914 = vadd.f32 %v838, %v913
        %v915 = vpop.f32.mrf.mxu0
        %916 = vdwg.mxu0
        %917 = vst [vmem:[%s327] sm:$0x1] %v914
        %s918 = sand.u32 %s227, 1
        %s919 = scalar_lea.sflag [#allocation4], %s918
        %s920 = sand.u32 %s227, 1
        %s921 = scalar_lea.vmem [#allocation3], %s920
        // Predicated region
        $region57: #{tpu_custom_call.1} parent=55 // pred_check
          %p922 = pneg %p237
        $region58: #{tpu_custom_call.1} parent=55 // pred_check_branch
          %924 = sbr.rel (%p922) target = $region60
        $region59: #{tpu_custom_call.1} parent=55 // pred_region
          %s926 = ssub.s32 16, 16
          %927 = vsyncadd %s919, %s926
          %s928 = smul.addr %s25, 16
          %s929 = scalar_lea.hbm %s9, %s928
          %s931 = sshll.u32 %s921, 4
          %s932 = int_to_ptr.vmem [resolvable:$true] %s931
          %934 = dma.vmem_to_hbm [thread:$0]  %s932, 16, %s929, %s919
        $region60: #{tpu_custom_call.1} parent=55 // pred_fallthru
          _
      $region56: #{tpu_custom_call.1} parent=5 // pred_fallthru
        _
      %p935 = scmp.le.s32.totalorder 2, %s20
      // Predicated region
      $region61: #{tpu_custom_call.1} parent=5 // pred_check
        %p936 = pneg %p935
      $region62: #{tpu_custom_call.1} parent=5 // pred_check_branch
        %938 = sbr.rel (%p936) target = $region64
      $region63: #{tpu_custom_call.1} parent=5 // pred_region
        %s939 = ssub.s32 %s20, 2
        // Predicated region
        $region65: #{tpu_custom_call.1} parent=63 // pred_check
          %p940 = pneg %p243
        $region66: #{tpu_custom_call.1} parent=63 // pred_check_branch
          %942 = sbr.rel (%p940) target = $region68
        $region67: #{tpu_custom_call.1} parent=63 // pred_region
          %s943 = sand.u32 %s228, 1
          %s944 = scalar_lea.sflag [#allocation4], %s943
          %s945 = sand.u32 %s228, 1
          %s946 = scalar_lea.vmem [#allocation3], %s945
          %947 = dma.done %s944, 16
        $region68: #{tpu_custom_call.1} parent=63 // pred_fallthru
          _
      $region64: #{tpu_custom_call.1} parent=5 // pred_fallthru
        _
    $region6: #{tpu_custom_call.1} parent=1 // loop_footer
      %s24 = sadd.s32 1, %s20
    $region7: #{tpu_custom_call.1} parent=1 // loop_footer_branch
      %19 = sbr.rel target = $region3
    $region8: #{tpu_custom_call.1} parent=1 // loop_exit
      _
    %948 = vsyncpa [#allocation4], 1
    %s949 = scalar_lea.sflag [#allocation4], 1
    %950 = vsyncpa %s949, 1

</llo_original>
